<compile_context>
chip_gen: v7x
topology: tpu7x:2x2x1
jax: 0.10.0
libtpu: 0.0.40
codegen_flags: <defaults>
</compile_context>

<pallas_src>
import functools

import jax
import jax.numpy as jnp
import numpy as np
from jax.experimental import pallas as pl
from jax.experimental.pallas import tpu as pltpu

LANE_CANDIDATES = (512, 256, 128)   # lane-dense widths (multiples of 128)
CHUNK_ELEMS = 128 * 1024            # per-chunk elems inside a block (bounds live temps)
REDUCE_BLOCK_ELEMS = 1024 * 1024    # per-input block for 'mean'/'sum'
NONE_BLOCK_ELEMS = 512 * 1024       # per-input block for 'none'
VMEM_LIMIT_BYTES = 32 * 1024 * 1024
SUBLANES = 8


def _round_up(a, b):
    return (a + b - 1) // b * b


def _cdiv(a, b):
    return (a + b - 1) // b


def _sublane_tile(dtype):
    # f32 -> 8, bf16/f16 -> 16, int8/fp8 -> 32
    return SUBLANES * max(1, 4 // jnp.dtype(dtype).itemsize)


def _loss_elem(x, t, base_loss, alpha, gamma, binary_targets):
    # Numerically stable BCE-with-logits (matches torch.nn.BCEWithLogitsLoss):
    #   max(x, 0) - x*t + log1p(exp(-|x|))
    e = jnp.exp(-jnp.abs(x))
    bce = jnp.maximum(x, 0.0) - x * t + jnp.log1p(e)
    if base_loss == "bce":
        return bce
    # focal
    if binary_targets:
        # pt from the already-computed exp(-|x|): saves one EUP exp/element.
        # Exact only for targets in {0, 1}, hence opt-in.
        inv = 1.0 / (1.0 + e)
        p = jnp.where(x >= 0, inv, e * inv)        # sigmoid(x)
        pt = t * p + (1.0 - t) * (1.0 - p)
        pt = jnp.minimum(pt, 1.0)
    else:
        pt = jnp.minimum(jnp.exp(-bce), 1.0)       # clamp: bce may underflow <0
    one_m_pt = 1.0 - pt                            # >= 0
    g = float(gamma)
    if g == 2.0:
        mod = one_m_pt * one_m_pt                  # VPU multiply, no EUP pow
    elif g == int(g) and g >= 1.0:
        mod = one_m_pt
        for _ in range(int(g) - 1):
            mod = mod * one_m_pt
    else:
        mod = one_m_pt ** g                        # base >= 0 -> NaN-safe
    return alpha * mod * bce


def _reduce_kernel(x_ref, t_ref, o_ref, *, base_loss, alpha, gamma, binary_targets,
                   block_rows, chunk_rows, num_chunks, lane_w, steps,
                   n_valid, mask_needed):
    i = pl.program_id(1)

    @pl.when(i == 0)
    def _():
        o_ref[...] = jnp.zeros_like(o_ref)

    # First global row of this block (grid indices are always in range because
    # steps * num_splits == blocks_total by construction).
    row0 = (pl.program_id(0) * steps + i) * block_rows
    full_rows = n_valid // lane_w
    rem = n_valid % lane_w

    def chunk_partial(r_start):
        x = x_ref[pl.ds(r_start, chunk_rows), :].astype(jnp.float32)
        t = t_ref[pl.ds(r_start, chunk_rows), :].astype(jnp.float32)
        loss = _loss_elem(x, t, base_loss, alpha, gamma, binary_targets)
        if mask_needed:
            rr = jax.lax.broadcasted_iota(jnp.int32, (chunk_rows, lane_w), 0)
            grow = row0 + r_start + rr
            valid = grow < full_rows
            if rem:
                ll = jax.lax.broadcasted_iota(jnp.int32, (chunk_rows, lane_w), 1)
                valid = valid | ((grow == full_rows) & (ll < rem))
            loss = jnp.where(valid, loss, 0.0)
        # Collapse chunk_rows -> 8 sublane-partials (tree of VPU adds).
        return loss.reshape(chunk_rows // SUBLANES, SUBLANES, lane_w).sum(axis=0)

    if num_chunks == 1:
        o_ref[...] += chunk_partial(0)
    else:
        def body(j, carry):
            r_start = pl.multiple_of(j * chunk_rows, chunk_rows)
            return carry + chunk_partial(r_start)

        o_ref[...] += jax.lax.fori_loop(
            0, num_chunks, body,
            jnp.zeros((SUBLANES, lane_w), jnp.float32), unroll=True)


def _elem_kernel(x_ref, t_ref, o_ref, *, base_loss, alpha, gamma, binary_targets,
                 chunk_rows, num_chunks):
    def do_chunk(r_start):
        x = x_ref[pl.ds(r_start, chunk_rows), :].astype(jnp.float32)
        t = t_ref[pl.ds(r_start, chunk_rows), :].astype(jnp.float32)
        loss = _loss_elem(x, t, base_loss, alpha, gamma, binary_targets)
        o_ref[pl.ds(r_start, chunk_rows), :] = loss.astype(o_ref.dtype)

    if num_chunks == 1:
        do_chunk(0)
    else:
        def body(j, carry):
            do_chunk(pl.multiple_of(j * chunk_rows, chunk_rows))
            return carry

        jax.lax.fori_loop(0, num_chunks, body, 0, unroll=True)


def complex_magnitude_loss(inputs, targets, *, base_loss="bce", reduction="mean",
                           alpha=1.0, gamma=2.0, binary_targets=False):
    """Pallas-TPU implementation of ComplexMagnitudeLoss.forward."""
    if base_loss not in ("bce", "focal"):
        raise ValueError(f"Unsupported base loss: {base_loss}")
    if reduction not in ("mean", "sum", "none"):
        raise ValueError(f"Unsupported reduction: {reduction}")

    orig_shape = inputs.shape
    n = int(np.prod(orig_shape))

    out_dtype = jnp.promote_types(inputs.dtype, targets.dtype)
    if not jnp.issubdtype(out_dtype, jnp.floating):
        out_dtype = jnp.float32

    if n == 0:
        if reduction == "none":
            return jnp.zeros(orig_shape, out_dtype)
        return jnp.array(jnp.nan, jnp.float32) if reduction == "mean" \
            else jnp.array(0.0, jnp.float32)

    # ---- lane-dense (rows, lane_w) view; no pad copy in the common case -----
    lane_w = next((c for c in LANE_CANDIDATES if n % c == 0), None)
    x = jnp.ravel(inputs)            # native dtype in HBM; cast per-tile in kernel
    t = jnp.ravel(targets)
    if lane_w is None:
        # Rare: n not a multiple of 128 -> pad by at most 127 elements.
        lane_w = LANE_CANDIDATES[-1]
        padded = _round_up(n, lane_w)
        x = jnp.pad(x, (0, padded - n))
        t = jnp.pad(t, (0, padded - n))
        rows = padded // lane_w
    else:
        rows = n // lane_w
    x2 = x.reshape(rows, lane_w)
    t2 = t.reshape(rows, lane_w)

    sub_in = max(_sublane_tile(inputs.dtype), _sublane_tile(targets.dtype))
    in_bytes = n * (jnp.dtype(inputs.dtype).itemsize + jnp.dtype(targets.dtype).itemsize)
    flops = (18 if base_loss == "focal" else 10) * n
    trans = (3 if base_loss == "focal" else 2) * n

    if reduction in ("mean", "sum"):
        chunk_full = max(sub_in, CHUNK_ELEMS // lane_w)
        max_block_rows = max(chunk_full, REDUCE_BLOCK_ELEMS // lane_w)
        rows_r = _round_up(rows, sub_in)
        if rows_r <= chunk_full:
            block_rows, chunk_rows, num_chunks = rows_r, rows_r, 1
        else:
            block_rows = min(max_block_rows, _round_up(rows_r, chunk_full))
            chunk_rows = chunk_full
            num_chunks = block_rows // chunk_rows
        blocks_total = _cdiv(rows, block_rows)
        # Even split only, so every grid index maps to a real block (no clamping).
        num_splits = 2 if (blocks_total >= 4 and blocks_total % 2 == 0) else 1
        steps = blocks_total // num_splits
        mask_needed = (blocks_total * block_rows * lane_w) != n

        kern = functools.partial(
            _reduce_kernel, base_loss=base_loss, alpha=float(alpha),
            gamma=float(gamma), binary_targets=bool(binary_targets),
            block_rows=block_rows, chunk_rows=chunk_rows, num_chunks=num_chunks,
            lane_w=lane_w, steps=steps, n_valid=n, mask_needed=mask_needed)
        in_spec = pl.BlockSpec((block_rows, lane_w), lambda c, i: (c * steps + i, 0))

        partials = pl.pallas_call(
            kern,
            out_shape=jax.ShapeDtypeStruct((num_splits * SUBLANES, lane_w),
                                           jnp.float32),
            grid_spec=pltpu.PrefetchScalarGridSpec(
                num_scalar_prefetch=0,
                grid=(num_splits, steps),
                in_specs=[in_spec, in_spec],
                out_specs=pl.BlockSpec((SUBLANES, lane_w), lambda c, i: (c, 0)),
            ),
            # 'parallel' split axis lets the scheduler shard across v7x's 2 TCs;
            # harmless on single-TC v5e/v6e.
            compiler_params=pltpu.CompilerParams(
                dimension_semantics=("parallel", "arbitrary"),
                vmem_limit_bytes=VMEM_LIMIT_BYTES),
            cost_estimate=pl.CostEstimate(
                flops=flops, transcendentals=trans,
                bytes_accessed=in_bytes + num_splits * SUBLANES * lane_w * 4),
        )(x2, t2)

        total = jnp.sum(partials)   # tiny (<=16, lane_w) cross-lane reduce in XLA
        if reduction == "mean":
            return total / np.float32(n)
        return total

    # ---- reduction == 'none' -------------------------------------------------
    sub_tile = max(sub_in, _sublane_tile(out_dtype))
    max_rows = max(sub_tile, NONE_BLOCK_ELEMS // lane_w)
    if rows <= max_rows:
        block_rows, grid_rows, out_rows = rows, 1, rows
    else:
        # Largest tile-aligned divisor of rows -> exact grid, no output padding.
        block_rows = 0
        d = (max_rows // sub_tile) * sub_tile
        while d >= sub_tile:
            if rows % d == 0:
                block_rows = d
                break
            d -= sub_tile
        if block_rows:
            grid_rows, out_rows = rows // block_rows, rows
        else:
            # Rare: no aligned divisor; pad output rows only (inputs are read via
            # a partial boundary block) and slice once at the end.
            block_rows = (max_rows // sub_tile) * sub_tile
            grid_rows = _cdiv(rows, block_rows)
            out_rows = grid_rows * block_rows

    chunk_full = max(sub_tile, CHUNK_ELEMS // lane_w)
    if block_rows > chunk_full and block_rows % chunk_full == 0:
        chunk_rows, num_chunks = chunk_full, block_rows // chunk_full
    else:
        chunk_rows, num_chunks = block_rows, 1

    kern = functools.partial(
        _elem_kernel, base_loss=base_loss, alpha=float(alpha), gamma=float(gamma),
        binary_targets=bool(binary_targets), chunk_rows=chunk_rows,
        num_chunks=num_chunks)
    tile = pl.BlockSpec((block_rows, lane_w), lambda i: (i, 0))

    out2 = pl.pallas_call(
        kern,
        out_shape=jax.ShapeDtypeStruct((out_rows, lane_w), out_dtype),
        grid_spec=pltpu.PrefetchScalarGridSpec(
            num_scalar_prefetch=0,
            grid=(grid_rows,),
            in_specs=[tile, tile],
            out_specs=tile,
        ),
        compiler_params=pltpu.CompilerParams(
            dimension_semantics=("parallel",),
            vmem_limit_bytes=VMEM_LIMIT_BYTES),
        cost_estimate=pl.CostEstimate(
            flops=flops, transcendentals=trans,
            bytes_accessed=in_bytes + n * jnp.dtype(out_dtype).itemsize),
    )(x2, t2)

    if out_rows * lane_w == n:
        return out2.reshape(orig_shape)      # free: exact element count
    return out2.reshape(-1)[:n].reshape(orig_shape)


# ----------------------- pure-JAX reference for checking -----------------------
def _ref_loss(inputs, targets, base_loss="bce", reduction="mean",
              alpha=1.0, gamma=2.0):
    x = inputs.astype(jnp.float32)
    t = targets.astype(jnp.float32)
    bce = jnp.maximum(x, 0.0) - x * t + jnp.log1p(jnp.exp(-jnp.abs(x)))
    if base_loss == "focal":
        pt = jnp.exp(-bce)
        loss = alpha * (1.0 - pt) ** gamma * bce
    else:
        loss = bce
    if reduction == "mean":
        return loss.mean()
    if reduction == "sum":
        return loss.sum()
    return loss


if __name__ == "__main__":
    key = jax.random.PRNGKey(0)
    k1, k2, k3, k4 = jax.random.split(key, 4)

    # Segmentation-style logits/targets (NCHW).
    inputs = jax.random.normal(k1, (2, 4, 16, 16), dtype=jnp.float32)
    targets = jax.random.bernoulli(k2, 0.5, (2, 4, 16, 16)).astype(jnp.float32)

    out = jax.block_until_ready(
        complex_magnitude_loss(inputs, targets, base_loss="bce", reduction="mean"))
    ref = _ref_loss(inputs, targets, "bce", "mean")
    np.testing.assert_allclose(np.asarray(out), np.asarray(ref), rtol=1e-5, atol=1e-5)

    out_f = jax.block_until_ready(
        complex_magnitude_loss(inputs, targets, base_loss="focal", reduction="mean"))
    ref_f = _ref_loss(inputs, targets, "focal", "mean")
    np.testing.assert_allclose(np.asarray(out_f), np.asarray(ref_f), rtol=1e-5, atol=1e-5)

    out_s = jax.block_until_ready(
        complex_magnitude_loss(inputs, targets, base_loss="bce", reduction="sum"))
    ref_s = _ref_loss(inputs, targets, "bce", "sum")
    np.testing.assert_allclose(np.asarray(out_s), np.asarray(ref_s), rtol=1e-5, atol=1e-4)

    out_n = jax.block_until_ready(
        complex_magnitude_loss(inputs, targets, base_loss="focal", reduction="none"))
    ref_n = _ref_loss(inputs, targets, "focal", "none")
    np.testing.assert_allclose(np.asarray(out_n), np.asarray(ref_n), rtol=1e-5, atol=1e-5)

    # Ragged row count (n = 2560 -> 5 rows of 512): exercises boundary-block
    # reads + in-kernel iota masking on the reduce path.
    inputs_r = jax.random.normal(k3, (2, 4, 16, 20), dtype=jnp.float32)
    targets_r = jax.random.bernoulli(k4, 0.5, (2, 4, 16, 20)).astype(jnp.float32)
    out_r = jax.block_until_ready(
        complex_magnitude_loss(inputs_r, targets_r, base_loss="bce", reduction="mean"))
    ref_r = _ref_loss(inputs_r, targets_r, "bce", "mean")
    np.testing.assert_allclose(np.asarray(out_r), np.asarray(ref_r), rtol=1e-5, atol=1e-5)

    # n = 105 (not a multiple of 128): exercises the minimal-pad fallback.
    inputs_o = jax.random.normal(k3, (3, 5, 7), dtype=jnp.float32)
    targets_o = jax.random.bernoulli(k4, 0.5, (3, 5, 7)).astype(jnp.float32)
    out_o = jax.block_until_ready(
        complex_magnitude_loss(inputs_o, targets_o, base_loss="focal", reduction="none"))
    ref_o = _ref_loss(inputs_o, targets_o, "focal", "none")
    np.testing.assert_allclose(np.asarray(out_o), np.asarray(ref_o), rtol=1e-5, atol=1e-5)
    out_om = jax.block_until_ready(
        complex_magnitude_loss(inputs_o, targets_o, base_loss="bce", reduction="sum"))
    ref_om = _ref_loss(inputs_o, targets_o, "bce", "sum")
    np.testing.assert_allclose(np.asarray(out_om), np.asarray(ref_om), rtol=1e-5, atol=1e-4)

    print("KERNEL_OK")
</pallas_src>

<mosaic_0001>
module attributes {stable_mosaic.version = 11 : i64} {
  func.func @_reduce_kernel(%arg0: i32, %arg1: i32, %arg2: memref<8x512xf32, #tpu.memory_space<vmem>>, %arg3: memref<8x512xf32, #tpu.memory_space<vmem>>, %arg4: memref<8x512xf32, #tpu.memory_space<vmem>>) attributes {dimension_semantics = [#tpu.dimension_semantics<parallel>, #tpu.dimension_semantics<arbitrary>], iteration_bounds = array<i64: 1, 1>, scalar_prefetch = 0 : i64, scratch_operands = 0 : i64, tpu.core_type = #tpu.core_type<tc>, window_params = [{transform_indices = @transform_0, window_bounds = array<i64: 8, 512>}, {transform_indices = @transform_1, window_bounds = array<i64: 8, 512>}, {transform_indices = @transform_2, window_bounds = array<i64: 8, 512>}]} {
    %c0_i32 = arith.constant 0 : i32
    %0 = arith.cmpi eq, %arg1, %c0_i32 : i32
    %1 = arith.extui %0 : i1 to i32
    %c0_i32_0 = arith.constant 0 : i32
    %2 = arith.cmpi ne, %1, %c0_i32_0 : i32
    scf.if %2 {
      %cst_12 = arith.constant 0.000000e+00 : f32
      %31 = vector.broadcast %cst_12 : f32 to vector<8x512xf32>
      %c0_13 = arith.constant 0 : index
      %c0_14 = arith.constant 0 : index
      %32 = vector.load %arg4[%c0_13, %c0_14] : memref<8x512xf32, #tpu.memory_space<vmem>>, vector<8x512xf32>
      tpu.vector_store %arg4[%c0_13, %c0_14], %31 {strides = array<i32>} : memref<8x512xf32, #tpu.memory_space<vmem>>, vector<8x512xf32>,
    } else {
    }
    %c1_i32 = arith.constant 1 : i32
    %3 = arith.muli %arg0, %c1_i32 : i32
    %4 = arith.addi %3, %arg1 : i32
    %c8_i32 = arith.constant 8 : i32
    %5 = arith.muli %4, %c8_i32 : i32
    %c0 = arith.constant 0 : index
    %c0_1 = arith.constant 0 : index
    %6 = vector.load %arg4[%c0, %c0_1] : memref<8x512xf32, #tpu.memory_space<vmem>>, vector<8x512xf32>
    %c0_2 = arith.constant 0 : index
    %c0_3 = arith.constant 0 : index
    %7 = vector.load %arg2[%c0_2, %c0_3] : memref<8x512xf32, #tpu.memory_space<vmem>>, vector<8x512xf32>
    %c0_4 = arith.constant 0 : index
    %c0_5 = arith.constant 0 : index
    %8 = vector.load %arg3[%c0_4, %c0_5] : memref<8x512xf32, #tpu.memory_space<vmem>>, vector<8x512xf32>
    %9 = math.absf %7 : vector<8x512xf32>
    %cst = arith.constant 0.000000e+00 : f32
    %10 = vector.broadcast %cst : f32 to vector<8x512xf32>
    %11 = arith.subf %10, %9 : vector<8x512xf32>
    %12 = math.exp %11 : vector<8x512xf32>
    %cst_6 = arith.constant 0.000000e+00 : f32
    %13 = vector.broadcast %cst_6 : f32 to vector<8x512xf32>
    %14 = arith.maximumf %7, %13 : vector<8x512xf32>
    %15 = arith.mulf %7, %8 : vector<8x512xf32>
    %16 = arith.subf %14, %15 : vector<8x512xf32>
    %17 = math.log1p %12 : vector<8x512xf32>
    %18 = arith.addf %16, %17 : vector<8x512xf32>
    %19 = tpu.iota {dimensions = array<i32: 0>} : vector<8x512xi32>
    %c0_i32_7 = arith.constant 0 : i32
    %20 = arith.addi %5, %c0_i32_7 : i32
    %21 = vector.broadcast %20 : i32 to vector<8x512xi32>
    %22 = arith.addi %21, %19 : vector<8x512xi32>
    %c4_i32 = arith.constant 4 : i32
    %23 = vector.broadcast %c4_i32 : i32 to vector<8x512xi32>
    %24 = arith.cmpi slt, %22, %23 : vector<8x512xi32>
    %cst_8 = arith.constant 0.000000e+00 : f32
    %25 = vector.broadcast %cst_8 : f32 to vector<8x512xf32>
    %26 = arith.select %24, %18, %25 : vector<8x512xi1>, vector<8x512xf32>
    %27 = vector.shape_cast %26 : vector<8x512xf32> to vector<1x8x512xf32>
    %cst_9 = arith.constant dense<0.000000e+00> : vector<8x512xf32>
    %28 = vector.multi_reduction <add>, %27, %cst_9 [0] : vector<1x8x512xf32> to vector<8x512xf32>
    %29 = arith.addf %6, %28 : vector<8x512xf32>
    %c0_10 = arith.constant 0 : index
    %c0_11 = arith.constant 0 : index
    %30 = vector.load %arg4[%c0_10, %c0_11] : memref<8x512xf32, #tpu.memory_space<vmem>>, vector<8x512xf32>
    tpu.vector_store %arg4[%c0_10, %c0_11], %29 {strides = array<i32>} : memref<8x512xf32, #tpu.memory_space<vmem>>, vector<8x512xf32>,
    return
  }
  func.func @transform_0(%arg0: i32, %arg1: i32) -> (i32, i32) {
    %c1_i32 = arith.constant 1 : i32
    %0 = arith.muli %arg0, %c1_i32 : i32
    %1 = arith.addi %0, %arg1 : i32
    %c0_i32 = arith.constant 0 : i32
    %c0_i32_0 = arith.constant 0 : i32
    return %1, %c0_i32 : i32, i32
  }
  func.func @transform_1(%arg0: i32, %arg1: i32) -> (i32, i32) {
    %c1_i32 = arith.constant 1 : i32
    %0 = arith.muli %arg0, %c1_i32 : i32
    %1 = arith.addi %0, %arg1 : i32
    %c0_i32 = arith.constant 0 : i32
    %c0_i32_0 = arith.constant 0 : i32
    return %1, %c0_i32 : i32, i32
  }
  func.func @transform_2(%arg0: i32, %arg1: i32) -> (i32, i32) {
    %c0_i32 = arith.constant 0 : i32
    %c0_i32_0 = arith.constant 0 : i32
    return %arg0, %c0_i32 : i32, i32
  }
}

</mosaic_0001>

<llo_original>
// kernel: tpu_custom_call.1
$region0: #{tpu_custom_call.1}
  #allocation0 [shape = 'u32[]', space=smem, size = 0x4, offset = 0x4, fixed_abs, tag = 'smem constant byte address 0x4 - core index']
  #allocation1 [shape = 'u32[144,128]{1,0:T(1,128)}', space=vmem, size = 0x12000, scoped, tag = 'internal scratch']
  %s0 = inlined_call_operand.hbm [shape: f32[4,512], index: 0, kind: input, shape index: {}]
  %s1 = inlined_call_operand.hbm [shape: f32[4,512], index: 1, kind: input, shape index: {}]
  %s2 = inlined_call_operand.hbm [shape: f32[8,512], index: 2, kind: output, shape index: {}]
  %s3 = sld [smem:[#allocation0]]
  $region30: #{tpu_custom_call.1} parent=0
    _
  %s5 = ssub.s32 1, %s3
  %s6 = scalar_select 0, %s5, %s3
  $region1: #{tpu_custom_call.1} parent=0
    #allocation2 [shape = 'u8[16384]{0}', space=vmem, size = 0x4000, scoped, tag = 'input window, operand 0, single buffered']
    #allocation3 [shape = 's32[1]{0}', space=sflag, size = 0x4, scoped, tag = 'scoped memory for tpu_custom_call.1']
    #allocation4 [shape = 's32[1]{0}', space=sflag, size = 0x4, scoped, tag = 'scoped memory for tpu_custom_call.1']
    #allocation5 [shape = 'u8[16384]{0}', space=vmem, size = 0x4000, scoped, tag = 'input window, operand 1, single buffered']
    #allocation6 [shape = 's32[1]{0}', space=sflag, size = 0x4, scoped, tag = 'scoped memory for tpu_custom_call.1']
    #allocation7 [shape = 'u8[16384]{0}', space=vmem, size = 0x4000, scoped, tag = 'output window, operand 0, single buffered']
    %7 = vsyncpa [#allocation3], 0
    %8 = vsyncpa [#allocation6], 0
    %9 = vsyncpa [#allocation4], 0
    // Predicated region
    $region2: #{tpu_custom_call.1} parent=1 // pred_check
      _
    $region3: #{tpu_custom_call.1} parent=1 // pred_check_branch
      %11 = sbr.rel (0) target = $region5
    $region4: #{tpu_custom_call.1} parent=1 // pred_region
      %s12 = sadd.s32 0, 0
      %s13 = smul.u32 2, %s12
      %s14 = ssub.s32 1, %s13
      %s15 = smul.u32 64, %s14
      %s16 = smul.u32 %s15, 4
      %s18 = ssub.s32 512, %s16
      %19 = vsyncadd [#allocation3], %s18
      %p20 = scmp.ne.s32.totalorder 0, %s16
      %s21 = smul.addr %s13, 4
      %s22 = smul.addr %s21, 64
      %s23 = scalar_lea.hbm %s0, %s22
      %s24 = smul.u32 16, %s14
      %s25 = sshll.u32 [#allocation2], 4
      %s26 = int_to_ptr.vmem [resolvable:$true] %s25
      %s27 = sshll.u32 %s24, 4
      %31 = dma.hbm_to_vmem [thread:$0]  (%p20), %s23, %s27, %s26, [#allocation3], 256, 256, 16
    $region5: #{tpu_custom_call.1} parent=1 // pred_fallthru
      _
    // Predicated region
    $region6: #{tpu_custom_call.1} parent=1 // pred_check
      _
    $region7: #{tpu_custom_call.1} parent=1 // pred_check_branch
      %33 = sbr.rel (0) target = $region9
    $region8: #{tpu_custom_call.1} parent=1 // pred_region
      %s34 = sadd.s32 0, 0
      %s35 = smul.u32 2, %s34
      %s36 = ssub.s32 1, %s35
      %s37 = smul.u32 64, %s36
      %s38 = smul.u32 %s37, 4
      %s40 = ssub.s32 512, %s38
      %41 = vsyncadd [#allocation6], %s40
      %p42 = scmp.ne.s32.totalorder 0, %s38
      %s43 = smul.addr %s35, 4
      %s44 = smul.addr %s43, 64
      %s45 = scalar_lea.hbm %s1, %s44
      %s46 = smul.u32 16, %s36
      %s47 = sshll.u32 [#allocation5], 4
      %s48 = int_to_ptr.vmem [resolvable:$true] %s47
      %s49 = sshll.u32 %s46, 4
      %53 = dma.hbm_to_vmem [thread:$0]  (%p42), %s45, %s49, %s48, [#allocation6], 256, 256, 16
    $region9: #{tpu_custom_call.1} parent=1 // pred_fallthru
      _
    // Predicated region
    $region10: #{tpu_custom_call.1} parent=1 // pred_check
      _
    $region11: #{tpu_custom_call.1} parent=1 // pred_check_branch
      %55 = sbr.rel (0) target = $region13
    $region12: #{tpu_custom_call.1} parent=1 // pred_region
      %56 = dma.done [#allocation3], 512
    $region13: #{tpu_custom_call.1} parent=1 // pred_fallthru
      _
    // Predicated region
    $region14: #{tpu_custom_call.1} parent=1 // pred_check
      _
    $region15: #{tpu_custom_call.1} parent=1 // pred_check_branch
      %58 = sbr.rel (0) target = $region17
    $region16: #{tpu_custom_call.1} parent=1 // pred_region
      %59 = dma.done [#allocation6], 512
    $region17: #{tpu_custom_call.1} parent=1 // pred_fallthru
      _
    %s60 = sadd.s32 0, 0
    %s61 = smul.u32 2, %s60
    %s62 = ssub.s32 1, %s61
    %s63 = smul.u32 64, %s62
    %s64 = smul.u32 %s63, 4
    %s65 = sadd.s32 0, 0
    %s66 = smul.u32 2, %s65
    %s67 = ssub.s32 1, %s66
    %s68 = smul.u32 64, %s67
    %s69 = smul.u32 %s68, 4
    %p70 = scmp.eq.s32.totalorder 0, 0
    // Predicated region
    $region18: #{tpu_custom_call.1} parent=1 // pred_check
      %p71 = pneg %p70
    $region19: #{tpu_custom_call.1} parent=1 // pred_check_branch
      %73 = sbr.rel (%p71) target = $region21
    $region20: #{tpu_custom_call.1} parent=1 // pred_region
      %74 = vst [vmem:[#allocation7] sm:$0xff] 0.0
      %75 = vst [vmem:[#allocation7 + $0x8] sm:$0xff] 0.0
      %76 = vst [vmem:[#allocation7 + $0x10] sm:$0xff] 0.0
      %77 = vst [vmem:[#allocation7 + $0x18] sm:$0xff] 0.0
    $region21: #{tpu_custom_call.1} parent=1 // pred_fallthru
      _
    %s78 = sadd.s32 0, 0
    %s79 = smul.u32 %s78, 8
    %v80 = vld [vmem:[#allocation7] sm:$0xff]
    %v81 = vld [vmem:[#allocation7 + $0x8] sm:$0xff]
    %v82 = vld [vmem:[#allocation7 + $0x10] sm:$0xff]
    %v83 = vld [vmem:[#allocation7 + $0x18] sm:$0xff]
    %v84 = vld [vmem:[#allocation2] sm:$0xff]
    %v85 = vld [vmem:[#allocation2 + $0x8] sm:$0xff]
    %v86 = vld [vmem:[#allocation2 + $0x10] sm:$0xff]
    %v87 = vld [vmem:[#allocation2 + $0x18] sm:$0xff]
    %v88 = vld [vmem:[#allocation5] sm:$0xff]
    %v89 = vld [vmem:[#allocation5 + $0x8] sm:$0xff]
    %v90 = vld [vmem:[#allocation5 + $0x10] sm:$0xff]
    %v91 = vld [vmem:[#allocation5 + $0x18] sm:$0xff]
    %v92 = vand.u32 2147483647, %v84
    %v93 = vand.u32 2147483647, %v85
    %v94 = vand.u32 2147483647, %v86
    %v95 = vand.u32 2147483647, %v87
    %v96 = vsub.f32 0.0, %v92
    %v97 = vsub.f32 0.0, %v93
    %v98 = vsub.f32 0.0, %v94
    %v99 = vsub.f32 0.0, %v95
    %v100 = vmul.f32 %v96, 1.442695
    %v101 = vpow.pop %v100
    %v102 = vmul.f32 %v97, 1.442695
    %v103 = vpow.pop %v102
    %v104 = vmul.f32 %v98, 1.442695
    %v105 = vpow.pop %v104
    %v106 = vmul.f32 %v99, 1.442695
    %v107 = vpow.pop %v106
    %v108 = vmax.f32 %v84, 0.0
    %v109 = vmax.f32 %v85, 0.0
    %v110 = vmax.f32 %v86, 0.0
    %v111 = vmax.f32 %v87, 0.0
    %v112 = vmul.f32 %v84, %v88
    %v113 = vmul.f32 %v85, %v89
    %v114 = vmul.f32 %v86, %v90
    %v115 = vmul.f32 %v87, %v91
    %v116 = vsub.f32 %v108, %v112
    %v117 = vsub.f32 %v109, %v113
    %v118 = vsub.f32 %v110, %v114
    %v119 = vsub.f32 %v111, %v115
    %v120 = vadd.f32 %v101, 1.0
    %v121 = vlog2.pop %v120
    %v122 = vmul.f32 %v121, 0.6931472
    %v123 = vmul.f32 -0.5, %v101
    %v124 = vadd.f32 %v123, 1.0
    %v125 = vmul.f32 %v124, %v101
    %v126 = vand.u32 2147483647, %v101
    %vm127 = vcmp.lt.f32.partialorder %v126, 0.0004427343
    %v128 = vsel %vm127, %v125, %v122
    %v129 = vadd.f32 %v103, 1.0
    %v130 = vlog2.pop %v129
    %v131 = vmul.f32 %v130, 0.6931472
    %v132 = vmul.f32 -0.5, %v103
    %v133 = vadd.f32 %v132, 1.0
    %v134 = vmul.f32 %v133, %v103
    %v135 = vand.u32 2147483647, %v103
    %vm136 = vcmp.lt.f32.partialorder %v135, 0.0004427343
    %v137 = vsel %vm136, %v134, %v131
    %v138 = vadd.f32 %v105, 1.0
    %v139 = vlog2.pop %v138
    %v140 = vmul.f32 %v139, 0.6931472
    %v141 = vmul.f32 -0.5, %v105
    %v142 = vadd.f32 %v141, 1.0
    %v143 = vmul.f32 %v142, %v105
    %v144 = vand.u32 2147483647, %v105
    %vm145 = vcmp.lt.f32.partialorder %v144, 0.0004427343
    %v146 = vsel %vm145, %v143, %v140
    %v147 = vadd.f32 %v107, 1.0
    %v148 = vlog2.pop %v147
    %v149 = vmul.f32 %v148, 0.6931472
    %v150 = vmul.f32 -0.5, %v107
    %v151 = vadd.f32 %v150, 1.0
    %v152 = vmul.f32 %v151, %v107
    %v153 = vand.u32 2147483647, %v107
    %vm154 = vcmp.lt.f32.partialorder %v153, 0.0004427343
    %v155 = vsel %vm154, %v152, %v149
    %v156 = vadd.f32 %v116, %v128
    %v157 = vadd.f32 %v117, %v137
    %v158 = vadd.f32 %v118, %v146
    %v159 = vadd.f32 %v119, %v155
    %v160 = vlaneseq
    %v161 = vshrl.u32 %v160, 7
    %v162 = vstv %s79
    %v163 = vadd.s32 %v162, %v161
    %vm164 = vcmp.lt.s32.totalorder %v163, 4
    %v169 = vcombine.low %v156, %v158
    %v170 = vcombine.high %v156, %v158
    %v171 = vcombine.low %v157, %v159
    %v172 = vcombine.high %v157, %v159
    %v177 = vsel %vm164, %v169, 0.0
    %v178 = vsel %vm164, %v170, 0.0
    %v179 = vsel %vm164, %v171, 0.0
    %v180 = vsel %vm164, %v172, 0.0
    %v181 = vadd.f32 %v177, 0.0
    %v182 = vadd.f32 %v178, 0.0
    %v183 = vadd.f32 %v179, 0.0
    %v184 = vadd.f32 %v180, 0.0
    %v185 = vadd.f32 %v80, %v181
    %v186 = vadd.f32 %v81, %v182
    %v187 = vadd.f32 %v82, %v183
    %v188 = vadd.f32 %v83, %v184
    %189 = vst [vmem:[#allocation7] sm:$0xff] %v185
    %190 = vst [vmem:[#allocation7 + $0x8] sm:$0xff] %v186
    %191 = vst [vmem:[#allocation7 + $0x10] sm:$0xff] %v187
    %192 = vst [vmem:[#allocation7 + $0x18] sm:$0xff] %v188
    // Predicated region
    $region22: #{tpu_custom_call.1} parent=1 // pred_check
      _
    $region23: #{tpu_custom_call.1} parent=1 // pred_check_branch
      %194 = sbr.rel (0) target = $region25
    $region24: #{tpu_custom_call.1} parent=1 // pred_region
      %s196 = ssub.s32 512, 512
      %197 = vsyncadd [#allocation4], %s196
      %s199 = sshll.u32 [#allocation7], 4
      %s200 = int_to_ptr.vmem [resolvable:$true] %s199
      %202 = dma.vmem_to_hbm [thread:$0]  %s200, 512, %s2, [#allocation4]
    $region25: #{tpu_custom_call.1} parent=1 // pred_fallthru
      _
    // Predicated region
    $region26: #{tpu_custom_call.1} parent=1 // pred_check
      _
    $region27: #{tpu_custom_call.1} parent=1 // pred_check_branch
      %204 = sbr.rel (0) target = $region29
    $region28: #{tpu_custom_call.1} parent=1 // pred_region
      %205 = dma.done [#allocation4], 512
    $region29: #{tpu_custom_call.1} parent=1 // pred_fallthru
      _
    %206 = vsyncpa [#allocation3], 1
    %207 = vsyncpa [#allocation6], 1
    %208 = vsyncpa [#allocation4], 1

</llo_original>
